<compile_context>
chip_gen: v5e
topology: v5e:2x2
jax: 0.10.0
libtpu: 0.0.40
codegen_flags: <defaults>
</compile_context>

<pallas_src>
from abc import ABC, abstractmethod

import jax
import jax.numpy as jnp
from jax.experimental import pallas as pl
from jax.experimental.pallas import tpu as pltpu


# ----------------------------- tiling helpers --------------------------------

_LANE = 128
_TARGET_BLOCK_BYTES = 6 * 1024 * 1024      # ~6 MiB per x / out block
_LANE_TILE_BYTES = 8 * 1024                # per sublane row: 2048 f32 / 4096 bf16
_VMEM_LIMIT_BYTES = 48 * 1024 * 1024       # > v5e 16 MiB default, < v7x 64 MiB phys
_RESIDENT_PARAM_BYTES = 4 * 1024 * 1024    # cap on lane-padded resident params


def _sublane_align(dtype) -> int:
    # Min sublane tile: 8 for 4-byte, 16 for 2-byte, 32 for 1-byte dtypes.
    itemsize = jnp.dtype(dtype).itemsize
    return max(8, 32 // itemsize)


def _round_down(x: int, m: int) -> int:
    return (x // m) * m


def _pick_tiles(nc: int, hw: int, itemsize: int, align: int):
    """Byte-budgeted (tm, tl).  Each returned dim is either the full dim or an
    aligned tile, so the BlockSpec is always legal and partial edge blocks are
    handled by the cdiv grid (no full-dim VMEM blow-up fallback)."""
    tl_cap = max(_LANE, _round_down(_LANE_TILE_BYTES // itemsize, _LANE))
    tl = hw if hw <= tl_cap else tl_cap
    tm_cap = max(align, _round_down(_TARGET_BLOCK_BYTES // (tl * itemsize), align))
    tm = nc if nc <= tm_cap else tm_cap
    return tm, tl


# ----------------------------- Pallas kernel --------------------------------

def _affine_transform_nchw_pallas(x, scale_c, shift_c):
    """y[n,c,h,w] = x[n,c,h,w] * scale_c[c] + shift_c[c], tiled Pallas kernel."""
    n, c, h, w = x.shape
    nc, hw = n * c, h * w
    itemsize = jnp.dtype(x.dtype).itemsize
    align = _sublane_align(x.dtype)

    tm, tl = _pick_tiles(nc, hw, itemsize, align)
    grid_m = pl.cdiv(nc, tm)   # row (N*C) blocks
    grid_l = pl.cdiv(hw, tl)   # lane (H*W) blocks

    x2 = x.reshape(nc, hw)

    # Per-row (n*c) affine params, kept in f32 (never quantized to x.dtype) and
    # zero-padded to grid_m*tm rows so the in-kernel row slice is always in
    # bounds even when the last row block of the cdiv grid is partial.
    nc_pad = grid_m * tm
    scale_rows = jnp.broadcast_to(
        scale_c.astype(jnp.float32)[None, :], (n, c)).reshape(nc, 1)
    shift_rows = jnp.broadcast_to(
        shift_c.astype(jnp.float32)[None, :], (n, c)).reshape(nc, 1)
    if nc_pad != nc:
        pad = ((0, nc_pad - nc), (0, 0))
        scale_rows = jnp.pad(scale_rows, pad)
        shift_rows = jnp.pad(shift_rows, pad)

    # Put the larger parallel extent first so v7x megacore sharding of the
    # parallel grid dims has something to split across its 2 TensorCores.
    swap = grid_l > grid_m
    if swap:
        grid = (grid_l, grid_m)         # (lane blocks, row blocks)
        x_map = lambda l, m: (m, l)
        row_axis = 1
    else:
        grid = (grid_m, grid_l)         # (row blocks, lane blocks)
        x_map = lambda m, l: (m, l)
        row_axis = 0

    # Params: resident full-array block (fetched once, sliced in-kernel) unless
    # N*C is pathologically large -- the (nc_pad, 1) block is lane-padded to 128
    # words/row in VMEM, so cap it and fall back to per-row-tile blocking.
    resident_params = (nc_pad * _LANE * 4 * 2) <= _RESIDENT_PARAM_BYTES
    if resident_params:
        param_block = (nc_pad, 1)
        param_map = lambda a, b: (0, 0)
    else:
        param_block = (tm, 1)
        param_map = (lambda l, m: (m, 0)) if swap else (lambda m, l: (m, 0))

    def kernel(x_ref, scale_ref, shift_ref, o_ref):
        if resident_params:
            r0 = pl.multiple_of(pl.program_id(row_axis) * tm, tm)
            s = scale_ref[pl.ds(r0, tm), :]      # (tm, 1) f32
            b = shift_ref[pl.ds(r0, tm), :]
        else:
            s = scale_ref[...]                   # (tm, 1) f32
            b = shift_ref[...]
        # f32 compute keeps v5e (no bf16 VALU) happy; HBM-bound so it is free.
        xv = x_ref[...].astype(jnp.float32)
        o_ref[...] = (xv * s + b).astype(o_ref.dtype)

    out2 = pl.pallas_call(
        kernel,
        out_shape=jax.ShapeDtypeStruct((nc, hw), x.dtype),
        grid=grid,
        in_specs=[
            pl.BlockSpec((tm, tl), x_map),
            pl.BlockSpec(param_block, param_map),
            pl.BlockSpec(param_block, param_map),
        ],
        out_specs=pl.BlockSpec((tm, tl), x_map),
        # Elementwise, same shape/dtype: alias x2 into the output.  The HBM
        # saving is only real when the caller donates x (jit + donate_argnums);
        # otherwise XLA inserts a defensive copy (still correct).
        input_output_aliases={0: 0},
        compiler_params=pltpu.CompilerParams(
            dimension_semantics=("parallel", "parallel"),
            vmem_limit_bytes=_VMEM_LIMIT_BYTES,
        ),
    )(x2, scale_rows, shift_rows)

    return out2.reshape(n, c, h, w)


_MIN_PALLAS_BYTES = 1 << 20  # below ~1 MiB the pallas_call launch overhead dominates


def affine_transform_nchw(x, scale_c, shift_c, *, force_pallas=False):
    """Dispatch: fused XLA elementwise for tiny inputs, Pallas kernel otherwise."""
    if not force_pallas and x.size * jnp.dtype(x.dtype).itemsize < _MIN_PALLAS_BYTES:
        y = (x.astype(jnp.float32) * scale_c[None, :, None, None]
             + shift_c[None, :, None, None])
        return y.astype(x.dtype)
    return _affine_transform_nchw_pallas(x, scale_c, shift_c)


# --------------------------- Adapter classes ---------------------------------

class BaseAugmentationAdapter(ABC):
    """JAX mirror of innofw's BaseAugmentationAdapter (ABC over a transform)."""

    def __init__(self, transforms):
        self.transforms = transforms

    @abstractmethod
    def forward(self, x):
        # TODO(synk): forward is abstract in the reference module; concrete
        # semantics are defined by subclasses (they apply self.transforms(x)).
        ...

    @staticmethod
    @abstractmethod
    def is_suitable_input(transform) -> bool:
        ...

    def __call__(self, x):
        return self.forward(x)


class PallasAffineAugmentationAdapter(BaseAugmentationAdapter):
    """Concrete adapter: applies a per-channel affine transform via Pallas."""

    def forward(self, x):
        return self.transforms(x)

    @staticmethod
    def is_suitable_input(transform) -> bool:
        return callable(transform)


# --------------------------------- Main --------------------------------------

if __name__ == "__main__":
    key = jax.random.PRNGKey(0)
    N, C, H, W = 2, 4, 16, 16
    x = jax.random.normal(key, (N, C, H, W), dtype=jnp.float32)

    # Deterministic per-channel augmentation parameters (synthetic).
    scale_c = jnp.linspace(0.5, 1.5, C, dtype=jnp.float32)
    shift_c = jnp.linspace(-0.1, 0.1, C, dtype=jnp.float32)

    # Reference computed before the kernel runs.
    y_ref = x * scale_c[None, :, None, None] + shift_c[None, :, None, None]

    # Force the Pallas path so the kernel actually executes at this demo size
    # (production dispatch uses plain jnp for inputs this small, and would wrap
    # the transform in jax.jit(..., donate_argnums=0) to realize the in-place
    # aliasing of x into the output).
    transform = lambda inp: affine_transform_nchw(inp, scale_c, shift_c,
                                                  force_pallas=True)
    assert PallasAffineAugmentationAdapter.is_suitable_input(transform)

    adapter = PallasAffineAugmentationAdapter(transform)
    y = jax.block_until_ready(adapter(x))

    assert y.shape == x.shape and y.dtype == x.dtype
    assert jnp.allclose(y, y_ref, atol=1e-6, rtol=1e-6)

    print("KERNEL_OK")
</pallas_src>

<mosaic_0001>
module attributes {stable_mosaic.version = 11 : i64} {
  func.func @kernel(%arg0: i32, %arg1: i32, %arg2: memref<8x256xf32, #tpu.memory_space<vmem>>, %arg3: memref<8x1xf32, #tpu.memory_space<vmem>>, %arg4: memref<8x1xf32, #tpu.memory_space<vmem>>, %arg5: memref<8x256xf32, #tpu.memory_space<vmem>>) attributes {dimension_semantics = [#tpu.dimension_semantics<parallel>, #tpu.dimension_semantics<parallel>], iteration_bounds = array<i64: 1, 1>, scalar_prefetch = 0 : i64, scratch_operands = 0 : i64, tpu.core_type = #tpu.core_type<tc>, window_params = [{transform_indices = @transform_0, window_bounds = array<i64: 8, 256>}, {pipeline_mode = #tpu.pipeline_mode<synchronous>, transform_indices = @transform_1, window_bounds = array<i64: 8, 1>}, {pipeline_mode = #tpu.pipeline_mode<synchronous>, transform_indices = @transform_2, window_bounds = array<i64: 8, 1>}, {transform_indices = @transform_3, window_bounds = array<i64: 8, 256>}]} {
    %c8_i32 = arith.constant 8 : i32
    %0 = arith.muli %arg0, %c8_i32 : i32
    %1 = tpu.assume_multiple %0, 8 : i32
    %2 = arith.index_cast %1 : i32 to index
    %c0 = arith.constant 0 : index
    %3 = vector.load %arg3[%2, %c0] : memref<8x1xf32, #tpu.memory_space<vmem>>, vector<8x1xf32>
    %4 = arith.index_cast %1 : i32 to index
    %c0_0 = arith.constant 0 : index
    %5 = vector.load %arg4[%4, %c0_0] : memref<8x1xf32, #tpu.memory_space<vmem>>, vector<8x1xf32>
    %c0_1 = arith.constant 0 : index
    %c0_2 = arith.constant 0 : index
    %6 = vector.load %arg2[%c0_1, %c0_2] : memref<8x256xf32, #tpu.memory_space<vmem>>, vector<8x256xf32>
    %7 = vector.broadcast %3 : vector<8x1xf32> to vector<8x256xf32>
    %8 = arith.mulf %6, %7 : vector<8x256xf32>
    %9 = vector.broadcast %5 : vector<8x1xf32> to vector<8x256xf32>
    %10 = arith.addf %8, %9 : vector<8x256xf32>
    %c0_3 = arith.constant 0 : index
    %c0_4 = arith.constant 0 : index
    %11 = vector.load %arg5[%c0_3, %c0_4] : memref<8x256xf32, #tpu.memory_space<vmem>>, vector<8x256xf32>
    tpu.vector_store %arg5[%c0_3, %c0_4], %10 {strides = array<i32>} : memref<8x256xf32, #tpu.memory_space<vmem>>, vector<8x256xf32>,
    return
  }
  func.func @transform_0(%arg0: i32, %arg1: i32) -> (i32, i32) {
    %c0_i32 = arith.constant 0 : i32
    return %arg0, %arg1 : i32, i32
  }
  func.func @transform_1(%arg0: i32, %arg1: i32) -> (i32, i32) {
    %c0_i32 = arith.constant 0 : i32
    %c0_i32_0 = arith.constant 0 : i32
    %c0_i32_1 = arith.constant 0 : i32
    return %c0_i32, %c0_i32_0 : i32, i32
  }
  func.func @transform_2(%arg0: i32, %arg1: i32) -> (i32, i32) {
    %c0_i32 = arith.constant 0 : i32
    %c0_i32_0 = arith.constant 0 : i32
    %c0_i32_1 = arith.constant 0 : i32
    return %c0_i32, %c0_i32_0 : i32, i32
  }
  func.func @transform_3(%arg0: i32, %arg1: i32) -> (i32, i32) {
    %c0_i32 = arith.constant 0 : i32
    return %arg0, %arg1 : i32, i32
  }
}

</mosaic_0001>

<llo_original>
// kernel: tpu_custom_call.1
$region0: #{tpu_custom_call.1}
  #allocation0 [shape = 'u32[]', space=smem, size = 0x4, offset = 0x4, fixed_abs, tag = 'smem constant byte address 0x4 - core index']
  #allocation1 [shape = 'u32[72,128]{1,0:T(1,128)}', space=vmem, size = 0x9000, scoped, tag = 'internal scratch']
  %s0 = inlined_call_operand.hbm [shape: f32[8,256], index: 0, kind: input, shape index: {}, may-alias: {0,3}]
  %s1 = inlined_call_operand.vmem [shape: f32[8,1], index: 1, kind: input, shape index: {}]
  %s2 = inlined_call_operand.vmem [shape: f32[8,1], index: 2, kind: input, shape index: {}]
  %s3 = inlined_call_operand.hbm [shape: f32[8,256], index: 3, kind: output, shape index: {}, may-alias: {0,3}]
  %s4 = sld [smem:[#allocation0]]
  $region26: #{tpu_custom_call.1} parent=0
    _
  %s6 = ssub.s32 1, %s4
  %s7 = scalar_select 0, %s6, %s4
  $region1: #{tpu_custom_call.1} parent=0
    #allocation2 [shape = 'u8[8192]{0}', space=vmem, size = 0x2000, scoped, tag = 'input window, operand 0, single buffered']
    #allocation3 [shape = 's32[1]{0}', space=sflag, size = 0x4, scoped, tag = 'scoped memory for tpu_custom_call.1']
    #allocation4 [shape = 's32[1]{0}', space=sflag, size = 0x4, scoped, tag = 'scoped memory for tpu_custom_call.1']
    #allocation5 [shape = 'u8[8192]{0}', space=vmem, size = 0x2000, scoped, tag = 'output window, operand 0, single buffered']
    %8 = vsyncpa [#allocation3], 0
    %9 = vsyncpa [#allocation4], 0
    // Predicated region
    $region2: #{tpu_custom_call.1} parent=1 // pred_check
      _
    $region3: #{tpu_custom_call.1} parent=1 // pred_check_branch
      %11 = sbr.rel (0) target = $region5
    $region4: #{tpu_custom_call.1} parent=1 // pred_region
      %13 = vsyncadd [#allocation3], 0
      %s15 = sshll.u32 %s0, 4
      %s16 = int_to_ptr.hbm [resolvable:$true] %s15
      %s17 = sshll.u32 [#allocation2], 4
      %s18 = int_to_ptr.vmem [resolvable:$true] %s17
      %20 = dma.hbm_to_vmem [thread:$0]  %s16, 256, %s18, [#allocation3]
    $region5: #{tpu_custom_call.1} parent=1 // pred_fallthru
      _
    // Predicated region
    $region6: #{tpu_custom_call.1} parent=1 // pred_check
      _
    $region7: #{tpu_custom_call.1} parent=1 // pred_check_branch
      %22 = sbr.rel (0) target = $region9
    $region8: #{tpu_custom_call.1} parent=1 // pred_region
      _
    $region9: #{tpu_custom_call.1} parent=1 // pred_fallthru
      _
    // Predicated region
    $region10: #{tpu_custom_call.1} parent=1 // pred_check
      _
    $region11: #{tpu_custom_call.1} parent=1 // pred_check_branch
      %24 = sbr.rel (0) target = $region13
    $region12: #{tpu_custom_call.1} parent=1 // pred_region
      _
    $region13: #{tpu_custom_call.1} parent=1 // pred_fallthru
      _
    // Predicated region
    $region14: #{tpu_custom_call.1} parent=1 // pred_check
      _
    $region15: #{tpu_custom_call.1} parent=1 // pred_check_branch
      %26 = sbr.rel (0) target = $region17
    $region16: #{tpu_custom_call.1} parent=1 // pred_region
      %28 = dma.done [#allocation3], 256
    $region17: #{tpu_custom_call.1} parent=1 // pred_fallthru
      _
    %s29 = smul.u32 0, 8
    %s30 = scalar_lea.vmem %s1, %s29
    %v31 = vld [vmem:[%s30] sm:$0xff]
    %s32 = scalar_lea.vmem %s2, %s29
    %v33 = vld [vmem:[%s32] sm:$0xff]
    %v34 = vld [vmem:[#allocation2] sm:$0xff]
    %v35 = vld [vmem:[#allocation2 + $0x8] sm:$0xff]
    %37 = vset.pattern.permute.xlu0 0
    %38 = vperm.xlu0 %37, %v31
    %v39 = vpop.permute.xlu0 %38
    %v41 = vmul.f32 %v34, %v39
    %v42 = vmul.f32 %v35, %v39
    %44 = vset.pattern.permute.xlu0 0
    %45 = vperm.xlu0 %44, %v33
    %v46 = vpop.permute.xlu0 %45
    %v48 = vadd.f32 %v41, %v46
    %v49 = vadd.f32 %v42, %v46
    %50 = vst [vmem:[#allocation5] sm:$0xff] %v48
    %51 = vst [vmem:[#allocation5 + $0x8] sm:$0xff] %v49
    // Predicated region
    $region18: #{tpu_custom_call.1} parent=1 // pred_check
      _
    $region19: #{tpu_custom_call.1} parent=1 // pred_check_branch
      %53 = sbr.rel (0) target = $region21
    $region20: #{tpu_custom_call.1} parent=1 // pred_region
      %55 = vsyncadd [#allocation4], 0
      %s57 = sshll.u32 [#allocation5], 4
      %s58 = int_to_ptr.vmem [resolvable:$true] %s57
      %s59 = sshll.u32 %s3, 4
      %s60 = int_to_ptr.hbm [resolvable:$true] %s59
      %62 = dma.vmem_to_hbm [thread:$0]  %s58, 256, %s60, [#allocation4]
    $region21: #{tpu_custom_call.1} parent=1 // pred_fallthru
      _
    // Predicated region
    $region22: #{tpu_custom_call.1} parent=1 // pred_check
      _
    $region23: #{tpu_custom_call.1} parent=1 // pred_check_branch
      %64 = sbr.rel (0) target = $region25
    $region24: #{tpu_custom_call.1} parent=1 // pred_region
      %66 = dma.done [#allocation4], 256
    $region25: #{tpu_custom_call.1} parent=1 // pred_fallthru
      _
    %67 = vsyncpa [#allocation3], 1
    %68 = vsyncpa [#allocation4], 1

</llo_original>
